<compile_context>
chip_gen: v7x
topology: tpu7x:2x2x1
jax: 0.10.0
libtpu: 0.0.40
codegen_flags: <defaults>
</compile_context>

<pallas_src>
import functools

import jax
import jax.numpy as jnp
from jax.experimental import pallas as pl
from jax.experimental.pallas import tpu as pltpu


def _round_up(x, m):
    return (x + m - 1) // m * m


def _dqn_hot2_kernel(x_ref, p_ref, o_ref, *, k_pad):
    """One batch tile of: relu(x @ W1 + b1) @ W2 + b2 (all padded to lane width W).

    Packed-parameter row layout (all offsets are multiples of 8):
      [0,            k_pad)        W1   (k_pad, W)   cols >= hidden are zero
      [k_pad,        k_pad + 8)    b1   in row 0 of this strip
      [k_pad + 8,    k_pad + 8+W)  W2   (W, W)        rows >= hidden / cols >= A are zero
      [k_pad + 8+W,  k_pad + 16+W) b2   in row 0 of this strip
    """
    W = p_ref.shape[1]
    r_b1 = k_pad
    r_w2 = k_pad + 8
    r_b2 = k_pad + 8 + W

    x = x_ref[...]                                   # (TB, k_pad)  f32
    w1 = p_ref[0:k_pad, :]                           # (k_pad, W)   f32
    b1 = p_ref[r_b1:r_b1 + 1, :]                     # (1, W)       f32
    w2 = p_ref[r_w2:r_w2 + W, :]                     # (W, W)       f32
    b2 = p_ref[r_b2:r_b2 + 1, :]                     # (1, W)       f32

    # fc1 + relu: bf16 MXU operands, f32 accumulate, f32 epilogue on the VPU.
    h = jnp.dot(x.astype(jnp.bfloat16), w1.astype(jnp.bfloat16),
                preferred_element_type=jnp.float32)
    h = jnp.maximum(h + b1, 0.0)

    # fc2 (no relu).
    o = jnp.dot(h.astype(jnp.bfloat16), w2.astype(jnp.bfloat16),
                preferred_element_type=jnp.float32)
    o_ref[...] = (o + b2).astype(o_ref.dtype)


def _pack_params(params, k_pad, w_lanes):
    """Pack (W1, b1, W2, b2) into one (k_pad + 8 + w_lanes + 8, w_lanes) f32 buffer."""
    w1, b1, w2, b2 = params
    k, hidden = w1.shape
    num_actions = w2.shape[1]

    rows = k_pad + 8 + w_lanes + 8
    buf = jnp.zeros((rows, w_lanes), jnp.float32)
    buf = buf.at[0:k, 0:hidden].set(w1.astype(jnp.float32))
    buf = buf.at[k_pad, 0:hidden].set(b1.astype(jnp.float32))
    buf = buf.at[k_pad + 8:k_pad + 8 + hidden, 0:num_actions].set(w2.astype(jnp.float32))
    buf = buf.at[k_pad + 8 + w_lanes, 0:num_actions].set(b2.astype(jnp.float32))
    return buf


def dqn_hot2_forward(x, params, *, tb_max=512):
    """x: (B, m, n) or (B, m*n); params = (W1 (m*n,100), b1 (100,), W2 (100,A), b2 (A,)).

    Returns (B, A) float32, matching PyTorch: fc2(relu(fc1(x.view(B, -1)))).
    """
    w1, b1, w2, b2 = params
    k, hidden = w1.shape
    num_actions = w2.shape[1]

    B = x.shape[0]
    x2d = x.reshape(B, -1).astype(jnp.float32)
    assert x2d.shape[1] == k, f"expected {k} input features, got {x2d.shape[1]}"

    # Padded geometry: sublane-aligned K, lane-aligned hidden/output width.
    k_pad = _round_up(k, 8)
    w_lanes = max(_round_up(hidden, 128), _round_up(num_actions, 128))

    # Batch tiling (TB multiple of 8; kept well inside v7x's 64 MiB VMEM even
    # with double-buffered x/out blocks).
    tb = min(tb_max, _round_up(B, 8))
    b_pad = _round_up(B, tb)
    nb = b_pad // tb

    # Pad activations to (b_pad, k_pad); extra rows/cols are zero.
    x_p = jnp.zeros((b_pad, k_pad), jnp.float32).at[:B, :k].set(x2d)

    p_buf = _pack_params(params, k_pad, w_lanes)
    rows = p_buf.shape[0]

    kernel = functools.partial(_dqn_hot2_kernel, k_pad=k_pad)

    out_p = pl.pallas_call(
        kernel,
        out_shape=jax.ShapeDtypeStruct((b_pad, w_lanes), jnp.float32),
        grid=(nb,),
        in_specs=[
            # Activations: tiled over the batch grid axis.
            pl.BlockSpec((tb, k_pad), lambda i: (i, 0)),
            # Packed weights: single block, VMEM-resident across all iterations.
            pl.BlockSpec((rows, w_lanes), lambda i: (0, 0)),
        ],
        out_specs=pl.BlockSpec((tb, w_lanes), lambda i: (i, 0)),
        compiler_params=pltpu.CompilerParams(
            dimension_semantics=("parallel",),
            vmem_limit_bytes=32 * 1024 * 1024,
        ),
    )(x_p, p_buf)

    # Drop batch/lane padding.
    return out_p[:B, :num_actions]


def init_params(key, m, n, num_actions):
    """PyTorch-style init: U(-1/sqrt(fan_in), 1/sqrt(fan_in)).

    Weights stored as (in_features, out_features); biases as (out_features,)."""
    def linear(key, fan_in, fan_out):
        kw, kb = jax.random.split(key)
        bound = 1.0 / jnp.sqrt(jnp.float32(fan_in))
        w = jax.random.uniform(kw, (fan_in, fan_out), jnp.float32, -bound, bound)
        b = jax.random.uniform(kb, (fan_out,), jnp.float32, -bound, bound)
        return w, b

    k1, k2 = jax.random.split(key)
    w1, b1 = linear(k1, m * n, 100)          # fc1: m*n -> 100
    w2, b2 = linear(k2, 100, num_actions)    # fc2: 100 -> num_actions
    return (w1, b1, w2, b2)


if __name__ == "__main__":
    key = jax.random.PRNGKey(0)
    m, n, num_actions = 4, 4, 4
    batch = 2

    kx, kp = jax.random.split(key)
    params = init_params(kp, m, n, num_actions)

    # Synthetic one-hot board: one hot position per board.
    pos = jax.random.randint(kx, (batch,), 0, m * n)
    x = jax.nn.one_hot(pos, m * n, dtype=jnp.float32).reshape(batch, m, n)

    out = dqn_hot2_forward(x, params)
    out = jax.block_until_ready(out)

    # Pure-JAX f32 reference of the forward-pass semantics.
    w1, b1, w2, b2 = params
    xf = x.reshape(batch, -1)
    ref = jnp.maximum(xf @ w1 + b1, 0.0) @ w2 + b2

    assert out.shape == (batch, num_actions)
    # bf16 MXU operands with f32 accumulation: error at these magnitudes ~1e-3.
    assert jnp.allclose(out, ref, atol=2e-2), "mismatch vs reference"

    print("KERNEL_OK")
</pallas_src>

<mosaic_0001>
module attributes {stable_mosaic.version = 11 : i64} {
  func.func @_dqn_hot2_kernel(%arg0: i32, %arg1: memref<8x16xf32, #tpu.memory_space<vmem>>, %arg2: memref<160x128xf32, #tpu.memory_space<vmem>>, %arg3: memref<8x128xf32, #tpu.memory_space<vmem>>) attributes {dimension_semantics = [#tpu.dimension_semantics<parallel>], iteration_bounds = array<i64: 1>, scalar_prefetch = 0 : i64, scratch_operands = 0 : i64, tpu.core_type = #tpu.core_type<tc>, window_params = [{transform_indices = @transform_0, window_bounds = array<i64: 8, 16>}, {pipeline_mode = #tpu.pipeline_mode<synchronous>, transform_indices = @transform_1, window_bounds = array<i64: 160, 128>}, {transform_indices = @transform_2, window_bounds = array<i64: 8, 128>}]} {
    %c0 = arith.constant 0 : index
    %c0_0 = arith.constant 0 : index
    %0 = vector.load %arg1[%c0, %c0_0] : memref<8x16xf32, #tpu.memory_space<vmem>>, vector<8x16xf32>
    %c0_1 = arith.constant 0 : index
    %c0_2 = arith.constant 0 : index
    %1 = vector.load %arg2[%c0_1, %c0_2] : memref<160x128xf32, #tpu.memory_space<vmem>>, vector<16x128xf32>
    %c16 = arith.constant 16 : index
    %c0_3 = arith.constant 0 : index
    %2 = vector.load %arg2[%c16, %c0_3] : memref<160x128xf32, #tpu.memory_space<vmem>>, vector<1x128xf32>
    %c24 = arith.constant 24 : index
    %c0_4 = arith.constant 0 : index
    %3 = vector.load %arg2[%c24, %c0_4] : memref<160x128xf32, #tpu.memory_space<vmem>>, vector<128x128xf32>
    %c152 = arith.constant 152 : index
    %c0_5 = arith.constant 0 : index
    %4 = vector.load %arg2[%c152, %c0_5] : memref<160x128xf32, #tpu.memory_space<vmem>>, vector<1x128xf32>
    %5 = arith.truncf %0 : vector<8x16xf32> to vector<8x16xbf16>
    %6 = arith.truncf %1 : vector<16x128xf32> to vector<16x128xbf16>
    %cst = arith.constant dense<0.000000e+00> : vector<8x128xf32>
    %7 = tpu.matmul %5, %6, %cst {dimension_numbers = #tpu.dot_dimension_numbers<[1], [0], [0], [1], [0, 0, 1, 1], [], []>} : vector<8x16xbf16>, vector<16x128xbf16>, vector<8x128xf32> -> vector<8x128xf32>
    %8 = vector.broadcast %2 : vector<1x128xf32> to vector<8x128xf32>
    %9 = arith.addf %7, %8 : vector<8x128xf32>
    %cst_6 = arith.constant 0.000000e+00 : f32
    %10 = vector.broadcast %cst_6 : f32 to vector<8x128xf32>
    %11 = arith.maximumf %9, %10 : vector<8x128xf32>
    %12 = arith.truncf %11 : vector<8x128xf32> to vector<8x128xbf16>
    %13 = arith.truncf %3 : vector<128x128xf32> to vector<128x128xbf16>
    %cst_7 = arith.constant dense<0.000000e+00> : vector<8x128xf32>
    %14 = tpu.matmul %12, %13, %cst_7 {dimension_numbers = #tpu.dot_dimension_numbers<[1], [0], [0], [1], [0, 0, 1, 1], [], []>} : vector<8x128xbf16>, vector<128x128xbf16>, vector<8x128xf32> -> vector<8x128xf32>
    %15 = vector.broadcast %4 : vector<1x128xf32> to vector<8x128xf32>
    %16 = arith.addf %14, %15 : vector<8x128xf32>
    %c0_8 = arith.constant 0 : index
    %c0_9 = arith.constant 0 : index
    %17 = vector.load %arg3[%c0_8, %c0_9] : memref<8x128xf32, #tpu.memory_space<vmem>>, vector<8x128xf32>
    tpu.vector_store %arg3[%c0_8, %c0_9], %16 {strides = array<i32>} : memref<8x128xf32, #tpu.memory_space<vmem>>, vector<8x128xf32>,
    return
  }
  func.func @transform_0(%arg0: i32) -> (i32, i32) {
    %c0_i32 = arith.constant 0 : i32
    %c0_i32_0 = arith.constant 0 : i32
    return %arg0, %c0_i32 : i32, i32
  }
  func.func @transform_1(%arg0: i32) -> (i32, i32) {
    %c0_i32 = arith.constant 0 : i32
    %c0_i32_0 = arith.constant 0 : i32
    %c0_i32_1 = arith.constant 0 : i32
    return %c0_i32, %c0_i32_0 : i32, i32
  }
  func.func @transform_2(%arg0: i32) -> (i32, i32) {
    %c0_i32 = arith.constant 0 : i32
    %c0_i32_0 = arith.constant 0 : i32
    return %arg0, %c0_i32 : i32, i32
  }
}

</mosaic_0001>

<llo_original>
// kernel: tpu_custom_call.1
$region0: #{tpu_custom_call.1}
  #allocation0 [shape = 'u32[]', space=smem, size = 0x4, offset = 0x4, fixed_abs, tag = 'smem constant byte address 0x4 - core index']
  #allocation1 [shape = 'u32[144,128]{1,0:T(1,128)}', space=vmem, size = 0x12000, scoped, tag = 'internal scratch']
  %s0 = inlined_call_operand.hbm [shape: f32[8,16], index: 0, kind: input, shape index: {}]
  %s1 = inlined_call_operand.hbm [shape: f32[160,128], index: 1, kind: input, shape index: {}]
  %s2 = inlined_call_operand.hbm [shape: f32[8,128], index: 2, kind: output, shape index: {}]
  %s3 = sld [smem:[#allocation0]]
  $region26: #{tpu_custom_call.1} parent=0
    _
  %s5 = ssub.s32 1, %s3
  %s6 = scalar_select 0, %s5, %s3
  $region1: #{tpu_custom_call.1} parent=0
    #allocation2 [shape = 'u8[4096]{0}', space=vmem, size = 0x1000, scoped, tag = 'input window, operand 0, single buffered']
    #allocation3 [shape = 's32[1]{0}', space=sflag, size = 0x4, scoped, tag = 'scoped memory for tpu_custom_call.1']
    #allocation4 [shape = 's32[1]{0}', space=sflag, size = 0x4, scoped, tag = 'scoped memory for tpu_custom_call.1']
    #allocation5 [shape = 'u8[81920]{0}', space=vmem, size = 0x14000, scoped, tag = 'input window, operand 1, single buffered']
    #allocation6 [shape = 's32[1]{0}', space=sflag, size = 0x4, scoped, tag = 'scoped memory for tpu_custom_call.1']
    #allocation7 [shape = 'u8[4096]{0}', space=vmem, size = 0x1000, scoped, tag = 'output window, operand 0, single buffered']
    %7 = vsyncpa [#allocation3], 0
    %8 = vsyncpa [#allocation6], 0
    %9 = vsyncpa [#allocation4], 0
    // Predicated region
    $region2: #{tpu_custom_call.1} parent=1 // pred_check
      _
    $region3: #{tpu_custom_call.1} parent=1 // pred_check_branch
      %11 = sbr.rel (0) target = $region5
    $region4: #{tpu_custom_call.1} parent=1 // pred_region
      %s13 = ssub.s32 128, 128
      %14 = vsyncadd [#allocation3], %s13
      %s16 = sshll.u32 [#allocation2], 4
      %s17 = int_to_ptr.vmem [resolvable:$true] %s16
      %19 = dma.hbm_to_vmem [thread:$0]  %s0, 128, %s17, [#allocation3]
    $region5: #{tpu_custom_call.1} parent=1 // pred_fallthru
      _
    // Predicated region
    $region6: #{tpu_custom_call.1} parent=1 // pred_check
      _
    $region7: #{tpu_custom_call.1} parent=1 // pred_check_branch
      %21 = sbr.rel (0) target = $region9
    $region8: #{tpu_custom_call.1} parent=1 // pred_region
      %s23 = ssub.s32 2560, 2560
      %24 = vsyncadd [#allocation6], %s23
      %s25 = sshll.u32 [#allocation5], 4
      %s26 = int_to_ptr.vmem [resolvable:$true] %s25
      %31 = dma.hbm_to_vmem [thread:$0]  %s1, 2560, %s26, [#allocation6], 128, 128, 8
    $region9: #{tpu_custom_call.1} parent=1 // pred_fallthru
      _
    // Predicated region
    $region10: #{tpu_custom_call.1} parent=1 // pred_check
      _
    $region11: #{tpu_custom_call.1} parent=1 // pred_check_branch
      %33 = sbr.rel (0) target = $region13
    $region12: #{tpu_custom_call.1} parent=1 // pred_region
      %34 = dma.done [#allocation3], 128
    $region13: #{tpu_custom_call.1} parent=1 // pred_fallthru
      _
    // Predicated region
    $region14: #{tpu_custom_call.1} parent=1 // pred_check
      _
    $region15: #{tpu_custom_call.1} parent=1 // pred_check_branch
      %36 = sbr.rel (0) target = $region17
    $region16: #{tpu_custom_call.1} parent=1 // pred_region
      %37 = dma.done [#allocation6], 2560
    $region17: #{tpu_custom_call.1} parent=1 // pred_fallthru
      _
    %v39 = vld [vmem:[#allocation2] sm:$0xff]
    %v40 = vld [vmem:[#allocation5] sm:$0xff]
    %v41 = vld [vmem:[#allocation5 + $0x8] sm:$0xff]
    %v42 = vld [vmem:[#allocation5 + $0x10] sm:$0x1]
    %v43 = vld [vmem:[#allocation5 + $0x18] sm:$0xff]
    %v44 = vld [vmem:[#allocation5 + $0x20] sm:$0xff]
    %v45 = vld [vmem:[#allocation5 + $0x28] sm:$0xff]
    %v46 = vld [vmem:[#allocation5 + $0x30] sm:$0xff]
    %v47 = vld [vmem:[#allocation5 + $0x38] sm:$0xff]
    %v48 = vld [vmem:[#allocation5 + $0x40] sm:$0xff]
    %v49 = vld [vmem:[#allocation5 + $0x48] sm:$0xff]
    %v50 = vld [vmem:[#allocation5 + $0x50] sm:$0xff]
    %v51 = vld [vmem:[#allocation5 + $0x58] sm:$0xff]
    %v52 = vld [vmem:[#allocation5 + $0x60] sm:$0xff]
    %v53 = vld [vmem:[#allocation5 + $0x68] sm:$0xff]
    %v54 = vld [vmem:[#allocation5 + $0x70] sm:$0xff]
    %v55 = vld [vmem:[#allocation5 + $0x78] sm:$0xff]
    %v56 = vld [vmem:[#allocation5 + $0x80] sm:$0xff]
    %v57 = vld [vmem:[#allocation5 + $0x88] sm:$0xff]
    %v58 = vld [vmem:[#allocation5 + $0x90] sm:$0xff]
    %v59 = vld [vmem:[#allocation5 + $0x98] sm:$0x1]
    %v60 = vpack.c.bf16 %v39, %v39
    %v61 = vpack.c.bf16 %v41, %v40
    %v62 = vlaneseq
    %v63 = vshrl.u32 %v62, 7
    %v64 = vsub.s32 0, %v63
    %v65 = vrot.slane %v42, %v64
    %vm66 = vcmask 130048
    %v68 = vsel %vm66, %v60, 0
    %70 = vmatprep.subr.bf16.mxu0 0
    %71 = vmatpush1.bf16.msra.mxu0 %v61
    %72 = vmatprep.subr.bf16.mxu0 0
    %73 = vmatpush1.bf16.msra.mxu0 0
    %74 = vmatprep.subr.bf16.mxu0 0
    %75 = vmatpush1.bf16.msra.mxu0 0
    %76 = vmatprep.subr.bf16.mxu0 0
    %77 = vmatpush1.bf16.msra.mxu0 0
    %78 = vmatprep.subr.bf16.mxu0 0
    %79 = vmatpush1.bf16.msra.mxu0 0
    %80 = vmatprep.subr.bf16.mxu0 0
    %81 = vmatpush1.bf16.msra.mxu0 0
    %82 = vmatprep.subr.bf16.mxu0 0
    %83 = vmatpush1.bf16.msra.mxu0 0
    %84 = vmatprep.subr.bf16.mxu0 0
    %85 = vmatpush1.bf16.msra.mxu0 0
    %86 = vmatprep.subr.bf16.mxu0 0
    %87 = vmatpush1.bf16.msra.mxu0 0
    %88 = vmatprep.subr.bf16.mxu0 0
    %89 = vmatpush1.bf16.msra.mxu0 0
    %90 = vmatprep.subr.bf16.mxu0 0
    %91 = vmatpush1.bf16.msra.mxu0 0
    %92 = vmatprep.subr.bf16.mxu0 0
    %93 = vmatpush1.bf16.msra.mxu0 0
    %94 = vmatprep.subr.bf16.mxu0 0
    %95 = vmatpush1.bf16.msra.mxu0 0
    %96 = vmatprep.subr.bf16.mxu0 0
    %97 = vmatpush1.bf16.msra.mxu0 0
    %98 = vmatprep.subr.bf16.mxu0 0
    %99 = vmatpush1.bf16.msra.mxu0 0
    %100 = vmatprep.subr.bf16.mxu0 0
    %101 = vmatpush1.bf16.msra.mxu0 0
    %102 = vmatprep.mubr.bf16.mxu0 0
    %103 = vmatmul.mubr.bf16.gmra.mrb[0].mxu0 %v68
    %v104 = vpop.f32.mrb[0].mxu0
    %v105 = vadd.f32 %v65, %v104
    %v106 = vpop.f32.mrb[0].mxu0
    %v107 = vpop.f32.mrb[0].mxu0
    %v108 = vpop.f32.mrb[0].mxu0
    %109 = vdwg.mxu0
    %v110 = vmax.f32 %v105, 0.0
    %v111 = vpack.c.bf16 %v110, %v110
    %v112 = vpack.c.bf16 %v44, %v43
    %v113 = vpack.c.bf16 %v46, %v45
    %v114 = vpack.c.bf16 %v48, %v47
    %v115 = vpack.c.bf16 %v50, %v49
    %v116 = vpack.c.bf16 %v52, %v51
    %v117 = vpack.c.bf16 %v54, %v53
    %v118 = vpack.c.bf16 %v56, %v55
    %v119 = vpack.c.bf16 %v58, %v57
    %v120 = vlaneseq
    %v121 = vshrl.u32 %v120, 7
    %v122 = vsub.s32 0, %v121
    %v123 = vrot.slane %v59, %v122
    %124 = vmatprep.subr.bf16.mxu0 0
    %125 = vmatpush1.bf16.msra.mxu0 %v112
    %126 = vmatprep.subr.bf16.mxu0 0
    %127 = vmatpush1.bf16.msra.mxu0 %v113
    %128 = vmatprep.subr.bf16.mxu0 0
    %129 = vmatpush1.bf16.msra.mxu0 %v114
    %130 = vmatprep.subr.bf16.mxu0 0
    %131 = vmatpush1.bf16.msra.mxu0 %v115
    %132 = vmatprep.subr.bf16.mxu0 0
    %133 = vmatpush1.bf16.msra.mxu0 %v116
    %134 = vmatprep.subr.bf16.mxu0 0
    %135 = vmatpush1.bf16.msra.mxu0 %v117
    %136 = vmatprep.subr.bf16.mxu0 0
    %137 = vmatpush1.bf16.msra.mxu0 %v118
    %138 = vmatprep.subr.bf16.mxu0 0
    %139 = vmatpush1.bf16.msra.mxu0 %v119
    %140 = vmatprep.subr.bf16.mxu0 0
    %141 = vmatpush1.bf16.msra.mxu0 0
    %142 = vmatprep.subr.bf16.mxu0 0
    %143 = vmatpush1.bf16.msra.mxu0 0
    %144 = vmatprep.subr.bf16.mxu0 0
    %145 = vmatpush1.bf16.msra.mxu0 0
    %146 = vmatprep.subr.bf16.mxu0 0
    %147 = vmatpush1.bf16.msra.mxu0 0
    %148 = vmatprep.subr.bf16.mxu0 0
    %149 = vmatpush1.bf16.msra.mxu0 0
    %150 = vmatprep.subr.bf16.mxu0 0
    %151 = vmatpush1.bf16.msra.mxu0 0
    %152 = vmatprep.subr.bf16.mxu0 0
    %153 = vmatpush1.bf16.msra.mxu0 0
    %154 = vmatprep.subr.bf16.mxu0 0
    %155 = vmatpush1.bf16.msra.mxu0 0
    %156 = vmatprep.mubr.bf16.mxu0 0
    %157 = vmatmul.mubr.bf16.gmra.mrb[0].mxu0 %v111
    %v158 = vpop.f32.mrb[0].mxu0
    %v159 = vadd.f32 %v123, %v158
    %v160 = vpop.f32.mrb[0].mxu0
    %v161 = vpop.f32.mrb[0].mxu0
    %v162 = vpop.f32.mrb[0].mxu0
    %163 = vdwg.mxu0
    %164 = vst [vmem:[#allocation7] sm:$0xff] %v159
    // Predicated region
    $region18: #{tpu_custom_call.1} parent=1 // pred_check
      _
    $region19: #{tpu_custom_call.1} parent=1 // pred_check_branch
      %166 = sbr.rel (0) target = $region21
    $region20: #{tpu_custom_call.1} parent=1 // pred_region
      %s168 = ssub.s32 128, 128
      %169 = vsyncadd [#allocation4], %s168
      %s171 = sshll.u32 [#allocation7], 4
      %s172 = int_to_ptr.vmem [resolvable:$true] %s171
      %174 = dma.vmem_to_hbm [thread:$0]  %s172, 128, %s2, [#allocation4]
    $region21: #{tpu_custom_call.1} parent=1 // pred_fallthru
      _
    // Predicated region
    $region22: #{tpu_custom_call.1} parent=1 // pred_check
      _
    $region23: #{tpu_custom_call.1} parent=1 // pred_check_branch
      %176 = sbr.rel (0) target = $region25
    $region24: #{tpu_custom_call.1} parent=1 // pred_region
      %177 = dma.done [#allocation4], 128
    $region25: #{tpu_custom_call.1} parent=1 // pred_fallthru
      _
    %178 = vsyncpa [#allocation3], 1
    %179 = vsyncpa [#allocation6], 1
    %180 = vsyncpa [#allocation4], 1

</llo_original>
